<compile_context>
chip_gen: v6e
topology: v6e:2x2x1
jax: 0.10.0
libtpu: 0.0.40
codegen_flags: <defaults>
</compile_context>

<pallas_src>
import functools
import math

import jax
import jax.numpy as jnp
from jax.experimental import pallas as pl
from jax.experimental.pallas import tpu as pltpu


# ---------------------------------------------------------------------------
# Kernel
# ---------------------------------------------------------------------------
def _lora_kernel(x_ref, at_ref, bt_ref, o_ref, *, scaling):
    """One (block_m x block_n) output tile of ((x @ A^T) * scaling) @ B^T.

    x_ref:  [block_m, in_features]   (VMEM)
    at_ref: [in_features, rank]      (VMEM, resident, pre-transposed A)
    bt_ref: [rank, block_n]          (VMEM, pre-transposed B, lane-padded)
    o_ref:  [block_m, block_n]       (VMEM)
    """
    # [bm, in] @ [in, rank] -> f32 [bm, rank] on the MXU (no transposes).
    xa = jnp.dot(x_ref[...], at_ref[...], preferred_element_type=jnp.float32)
    # Apply the LoRA scale in f32, then drop to the weight dtype so the second
    # matmul runs at weight precision (bf16 MXU path when weights are bf16).
    xa = (xa * scaling).astype(bt_ref.dtype)
    # [bm, rank] @ [rank, bn] -> f32 accumulate, cast to the output dtype.
    o_ref[...] = jnp.dot(
        xa, bt_ref[...], preferred_element_type=jnp.float32
    ).astype(o_ref.dtype)


# ---------------------------------------------------------------------------
# Tiling heuristics
# ---------------------------------------------------------------------------
def _round_up(x, n):
    return ((x + n - 1) // n) * n


def _vmem_budgets():
    """(tile_budget_bytes, vmem_limit_bytes), derived from the chip's VMEM."""
    try:
        cap = int(pltpu.get_tpu_info().vmem_capacity_bytes)
    except Exception:  # not on TPU / interpret mode -> conservative v7x number
        cap = 64 * 1024 * 1024
    return int(0.38 * cap), int(0.72 * cap)


def _pick_blocks(m, in_features, rank, out_padded,
                 x_itemsize, w_itemsize, out_itemsize,
                 budget_bytes, max_block_m=512):
    """Pick (block_m, block_n) under an honest double-buffered VMEM budget."""
    sublane = 16 if min(x_itemsize, out_itemsize) < 4 else 8
    in_padded = _round_up(in_features, 128)       # lane padding of x's last dim
    rank_lanes = _round_up(rank, 128)             # lane padding of A^T / xa
    m_rounded = _round_up(max(m, 1), sublane)

    # Resident A^T [in, rank] still gets 2 pipeline buffers; it is lane-padded.
    a_bytes = 2 * _round_up(in_features, 8) * rank_lanes * w_itemsize

    def vmem_bytes(bm, bn):
        x_bytes = 2 * bm * in_padded * x_itemsize              # double-buffered x
        bt_bytes = 2 * max(rank, 8) * bn * w_itemsize           # double-buffered B^T
        out_bytes = 2 * bm * bn * out_itemsize                  # double-buffered out
        xa_bytes = bm * rank_lanes * 4                          # f32 intermediate
        res_bytes = bm * bn * 4                                 # f32 result pre-astype
        return a_bytes + x_bytes + bt_bytes + out_bytes + xa_bytes + res_bytes

    def best_bm(bn):
        bm = min(max_block_m, m_rounded)
        bm = max(sublane, (bm // sublane) * sublane)
        while bm > sublane and vmem_bytes(bm, bn) > budget_bytes:
            bm = max(sublane, ((bm // 2) // sublane) * sublane)
        return bm

    # Start with the full lane-padded output width; only add the out_features
    # grid axis (shrink block_n) when block_m would otherwise fall below ~256.
    bn = out_padded
    bm = best_bm(bn)
    while bm < min(256, m_rounded) and bn > 128:
        bn = max(128, _round_up(bn // 2, 128))
        bm = best_bm(bn)

    grid_n = pl.cdiv(out_padded, bn)
    if grid_n == 1 and m > sublane:
        # Guarantee >= 2 row-grid steps so both v7x TensorCores get work
        # (harmless on single-TC v5e/v6e).
        bm = min(bm, _round_up(pl.cdiv(m, 2), sublane))
    bm = min(bm, m_rounded)
    bm = max(sublane, (bm // sublane) * sublane)
    return bm, bn


# ---------------------------------------------------------------------------
# Wrapper
# ---------------------------------------------------------------------------
def lora_forward(x, lora_a_weight, lora_b_weight, *, alpha=32.0, rank=8,
                 base_weight=None, out_dtype=None,
                 block_m=None, block_n=None):
    """LoRALayer.forward in Pallas.

    x:             [..., in_features]
    lora_a_weight: [rank, in_features]   (PyTorch nn.Linear [out, in] layout)
    lora_b_weight: [out_features, rank]
    returns:       [..., out_features]  (dtype = out_dtype or x.dtype)
    """
    # TODO(synk): base_weight path (F.linear(x, base_weight)) not fused; the
    # reference module constructs with base_weight=None so base_output == 0.
    assert base_weight is None
    # TODO(synk): dropout>0 not implemented; the module defaults to Identity.

    scaling = float(alpha) / float(rank)
    in_features = x.shape[-1]
    out_features = lora_b_weight.shape[0]
    lead_shape = x.shape[:-1]
    out_dtype = x.dtype if out_dtype is None else out_dtype

    x2d = x.reshape(-1, in_features)
    m = x2d.shape[0]

    # One-time wrapper-side prep of the tiny LoRA weights: pre-transpose both
    # (no per-grid-step transposes in the kernel) and zero-pad B^T's output dim
    # to a multiple of 128 so stores are lane-dense unmasked vst.
    a_t = lora_a_weight.T                              # [in_features, rank]
    b_t = lora_b_weight.T                              # [rank, out_features]
    out_padded = _round_up(out_features, 128)
    if out_padded != out_features:
        b_t = jnp.pad(b_t, ((0, 0), (0, out_padded - out_features)))

    budget_bytes, vmem_limit = _vmem_budgets()
    if block_m is None or block_n is None:
        bm, bn = _pick_blocks(
            m, in_features, rank, out_padded,
            jnp.dtype(x.dtype).itemsize,
            jnp.dtype(b_t.dtype).itemsize,
            jnp.dtype(out_dtype).itemsize,
            budget_bytes)
        block_m = bm if block_m is None else block_m
        block_n = bn if block_n is None else block_n

    grid = (pl.cdiv(m, block_m), pl.cdiv(out_padded, block_n))
    # Inner (fastest) grid axis is the output-column axis; x's block index does
    # not depend on it, so x is fetched once per row tile. Ragged last blocks
    # are handled by Pallas' masked writeback (see note at top of file).

    kernel = functools.partial(_lora_kernel, scaling=scaling)

    out2d = pl.pallas_call(
        kernel,
        out_shape=jax.ShapeDtypeStruct((m, out_padded), out_dtype),
        grid_spec=pltpu.PrefetchScalarGridSpec(
            num_scalar_prefetch=0,
            grid=grid,
            in_specs=[
                pl.BlockSpec((block_m, in_features), lambda i, j: (i, 0)),
                pl.BlockSpec((in_features, a_t.shape[1]), lambda i, j: (0, 0)),
                pl.BlockSpec((b_t.shape[0], block_n), lambda i, j: (0, j)),
            ],
            out_specs=pl.BlockSpec((block_m, block_n), lambda i, j: (i, j)),
        ),
        compiler_params=pltpu.CompilerParams(
            dimension_semantics=("parallel", "parallel"),
            vmem_limit_bytes=int(vmem_limit),
        ),
    )(x2d, a_t, b_t)

    if out_padded != out_features:
        out2d = out2d[:, :out_features]
    return out2d.reshape(*lead_shape, out_features)


# ---------------------------------------------------------------------------
# Reference & test
# ---------------------------------------------------------------------------
def _reference(x, a_w, b_w, alpha, rank):
    scaling = alpha / rank
    return (x @ a_w.T @ b_w.T) * scaling


if __name__ == "__main__":
    # Small deterministic setup consistent with the module:
    #   batch=2, seq=8 (leading dims), in_features=32, out_features=32, rank=8
    batch, seq = 2, 8
    in_features, out_features, rank = 32, 32, 8
    alpha = 32.0

    key = jax.random.PRNGKey(0)
    kx, ka, kb = jax.random.split(key, 3)

    x = jax.random.normal(kx, (batch, seq, in_features), dtype=jnp.float32)

    # Deterministic parameter init. PyTorch uses kaiming_uniform for lora_A and
    # zeros for lora_B (which would make the output trivially zero); lora_B is
    # drawn from the same deterministic key stream so the kernel output is
    # non-trivial and checkable, matching shapes exactly.
    bound_a = math.sqrt(6.0 / in_features) / math.sqrt(1.0 + 5.0)
    lora_a_weight = jax.random.uniform(
        ka, (rank, in_features), minval=-bound_a, maxval=bound_a,
        dtype=jnp.float32)
    lora_b_weight = 0.02 * jax.random.normal(
        kb, (out_features, rank), dtype=jnp.float32)

    out = lora_forward(x, lora_a_weight, lora_b_weight, alpha=alpha, rank=rank)
    out = jax.block_until_ready(out)

    ref = _reference(x, lora_a_weight, lora_b_weight, alpha, rank)
    assert out.shape == (batch, seq, out_features)
    assert jnp.allclose(out, ref, atol=1e-5, rtol=1e-5), "f32 mismatch vs reference"

    # Second small check: out_features already a multiple of 128 (no padding /
    # slice path) and in_features off the lane grid, exercising the 2-D grid
    # plumbing and full-extent feature blocks.
    in2, out2, m2 = 160, 384, 64
    kx2, ka2, kb2 = jax.random.split(jax.random.PRNGKey(1), 3)
    x2 = jax.random.normal(kx2, (m2, in2), dtype=jnp.float32)
    a2 = 0.05 * jax.random.normal(ka2, (rank, in2), dtype=jnp.float32)
    b2 = 0.02 * jax.random.normal(kb2, (out2, rank), dtype=jnp.float32)
    out_2 = jax.block_until_ready(
        lora_forward(x2, a2, b2, alpha=alpha, rank=rank))
    ref_2 = _reference(x2, a2, b2, alpha, rank)
    assert out_2.shape == (m2, out2)
    assert jnp.allclose(out_2, ref_2, atol=1e-5, rtol=1e-5), "wide-out mismatch"

    print("KERNEL_OK")
</pallas_src>

<mosaic_0001>
module attributes {stable_mosaic.version = 11 : i64} {
  func.func @_lora_kernel(%arg0: i32, %arg1: i32, %arg2: memref<8x32xf32, #tpu.memory_space<vmem>>, %arg3: memref<32x8xf32, #tpu.memory_space<vmem>>, %arg4: memref<8x128xf32, #tpu.memory_space<vmem>>, %arg5: memref<8x128xf32, #tpu.memory_space<vmem>>) attributes {dimension_semantics = [#tpu.dimension_semantics<parallel>, #tpu.dimension_semantics<parallel>], iteration_bounds = array<i64: 2, 1>, scalar_prefetch = 0 : i64, scratch_operands = 0 : i64, tpu.core_type = #tpu.core_type<tc>, window_params = [{transform_indices = @transform_0, window_bounds = array<i64: 8, 32>}, {pipeline_mode = #tpu.pipeline_mode<synchronous>, transform_indices = @transform_1, window_bounds = array<i64: 32, 8>}, {transform_indices = @transform_2, window_bounds = array<i64: 8, 128>}, {transform_indices = @transform_3, window_bounds = array<i64: 8, 128>}]} {
    %c0 = arith.constant 0 : index
    %c0_0 = arith.constant 0 : index
    %0 = vector.load %arg2[%c0, %c0_0] : memref<8x32xf32, #tpu.memory_space<vmem>>, vector<8x32xf32>
    %c0_1 = arith.constant 0 : index
    %c0_2 = arith.constant 0 : index
    %1 = vector.load %arg3[%c0_1, %c0_2] : memref<32x8xf32, #tpu.memory_space<vmem>>, vector<32x8xf32>
    %cst = arith.constant dense<0.000000e+00> : vector<8x8xf32>
    %2 = tpu.matmul %0, %1, %cst {dimension_numbers = #tpu.dot_dimension_numbers<[1], [0], [0], [1], [0, 0, 1, 1], [], []>} : vector<8x32xf32>, vector<32x8xf32>, vector<8x8xf32> -> vector<8x8xf32>
    %cst_3 = arith.constant 4.000000e+00 : f32
    %3 = vector.broadcast %cst_3 : f32 to vector<8x8xf32>
    %4 = arith.mulf %2, %3 : vector<8x8xf32>
    %c0_4 = arith.constant 0 : index
    %c0_5 = arith.constant 0 : index
    %5 = vector.load %arg4[%c0_4, %c0_5] : memref<8x128xf32, #tpu.memory_space<vmem>>, vector<8x128xf32>
    %cst_6 = arith.constant dense<0.000000e+00> : vector<8x128xf32>
    %6 = tpu.matmul %4, %5, %cst_6 {dimension_numbers = #tpu.dot_dimension_numbers<[1], [0], [0], [1], [0, 0, 1, 1], [], []>} : vector<8x8xf32>, vector<8x128xf32>, vector<8x128xf32> -> vector<8x128xf32>
    %c0_7 = arith.constant 0 : index
    %c0_8 = arith.constant 0 : index
    %7 = vector.load %arg5[%c0_7, %c0_8] : memref<8x128xf32, #tpu.memory_space<vmem>>, vector<8x128xf32>
    tpu.vector_store %arg5[%c0_7, %c0_8], %6 {strides = array<i32>} : memref<8x128xf32, #tpu.memory_space<vmem>>, vector<8x128xf32>,
    return
  }
  func.func @transform_0(%arg0: i32, %arg1: i32) -> (i32, i32) {
    %c0_i32 = arith.constant 0 : i32
    %c0_i32_0 = arith.constant 0 : i32
    return %arg0, %c0_i32 : i32, i32
  }
  func.func @transform_1(%arg0: i32, %arg1: i32) -> (i32, i32) {
    %c0_i32 = arith.constant 0 : i32
    %c0_i32_0 = arith.constant 0 : i32
    %c0_i32_1 = arith.constant 0 : i32
    return %c0_i32, %c0_i32_0 : i32, i32
  }
  func.func @transform_2(%arg0: i32, %arg1: i32) -> (i32, i32) {
    %c0_i32 = arith.constant 0 : i32
    %c0_i32_0 = arith.constant 0 : i32
    return %c0_i32, %arg1 : i32, i32
  }
  func.func @transform_3(%arg0: i32, %arg1: i32) -> (i32, i32) {
    %c0_i32 = arith.constant 0 : i32
    return %arg0, %arg1 : i32, i32
  }
}

</mosaic_0001>

<llo_original>
// kernel: tpu_custom_call.1
$region0: #{tpu_custom_call.1}
  #allocation0 [shape = 'u32[]', space=smem, size = 0x4, offset = 0x4, fixed_abs, tag = 'smem constant byte address 0x4 - core index']
  #allocation1 [shape = 'u32[144,128]{1,0:T(1,128)}', space=vmem, size = 0x12000, scoped, tag = 'internal scratch']
  %s0 = inlined_call_operand.vmem [shape: f32[16,32], index: 0, kind: input, shape index: {}]
  %s1 = inlined_call_operand.vmem [shape: f32[32,8], index: 1, kind: input, shape index: {}]
  %s2 = inlined_call_operand.vmem [shape: f32[8,128], index: 2, kind: input, shape index: {}]
  %s3 = inlined_call_operand.hbm [shape: f32[16,128], index: 3, kind: output, shape index: {}]
  %s4 = sld [smem:[#allocation0]]
  $region45: #{tpu_custom_call.1} parent=0
    _
  %s6 = ssub.s32 1, %s4
  %s7 = scalar_select 0, %s6, %s4
  $region1: #{tpu_custom_call.1} parent=0
    #allocation2 [shape = 'u8[8192]{0}', space=vmem, size = 0x2000, scoped, tag = 'output window, operand 0']
    #allocation3 [shape = 's32[2]{0}', space=sflag, size = 0x8, scoped, tag = 'scoped memory for tpu_custom_call.1']
    %8 = vsyncpa [#allocation3], 0
    %s9 = scalar_lea.sflag [#allocation3], 1
    %10 = vsyncpa %s9, 0
    loop: start=0, step=1, limit=4
    $region2: #{tpu_custom_call.1} parent=1 // loop_pre_header
      _
    $region3: #{tpu_custom_call.1} parent=1 // loop_header
      %s12 = sphi 0, %s16
      %p13 = scmp.ge.s32.totalorder %s12, 4
      %s19 = sphi 0, %s31
      %s20 = sphi 0, %s27
      %s21 = sphi 0, %s19
      %s22 = sphi 0, %s20
      %s23 = sphi 0, %s21
      %s24 = sphi 0, %s22
      %s34 = sphi 0, %s36
      %s37 = sphi 0, %s34
      %s38 = sphi 0, %s37
      %s54 = sphi 0, %s38
      %s58 = sphi 0, %s58
      %s60 = sphi 0, %s58
      %s61 = sphi 0, %s60
      %s75 = sphi 0, %s61
      %s81 = sphi 0, %s83
      %s84 = sphi 0, %s81
      %s85 = sphi 0, %s84
      %s101 = sphi 0, %s85
      %s109 = sphi 0, %s111
      %s112 = sphi 0, %s109
      %s113 = sphi 0, %s112
      %s129 = sphi 0, %s113
    $region4: #{tpu_custom_call.1} parent=1 // loop_header_branch
      %15 = sbr.rel (%p13) target = $region8
    $region5: #{tpu_custom_call.1} parent=1 // loop_body
      %s17 = ssub.s32 %s12, 1
      %s18 = ssub.s32 %s12, 2
      %s25 = sadd.s32 1, %s20
      %p26 = scmp.ge.s32.totalorder %s25, 1
      %s27 = scalar_select %p26, 0, %s25
      %s28 = sadd.s32 1, %s19
      %s29 = scalar_select %p26, %s28, %s19
      %p30 = scmp.ge.s32.totalorder %s29, 2
      %s31 = scalar_select %p30, 0, %s29
      %s32 = ssub.s32 %s19, %s31
      %p33 = scmp.eq.s32.totalorder %s32, 0
      %s35 = sadd.s32 %s34, 1
      %s36 = scalar_select %p33, %s34, %s35
      %p39 = pneg %p33
      %p40 = scmp.eq.s32.totalorder %s12, 1
      %p41 = por %p39, %p40
      %p42 = scmp.ne.s32.totalorder %s34, %s37
      %p43 = scmp.eq.s32.totalorder %s12, 0
      %p44 = por %p42, %p43
      %p45 = scmp.ne.s32.totalorder %s34, %s37
      %p46 = scmp.eq.s32.totalorder %s17, 1
      %p47 = por %p45, %p46
      %p48 = scmp.ne.s32.totalorder %s37, %s38
      %p49 = scmp.eq.s32.totalorder %s17, 0
      %p50 = por %p48, %p49
      %p51 = scmp.ne.s32.totalorder %s37, %s38
      %p52 = scmp.eq.s32.totalorder %s18, 1
      %p53 = por %p51, %p52
      %p55 = scmp.ne.s32.totalorder %s38, %s54
      %p56 = scmp.eq.s32.totalorder %s18, 0
      %p57 = por %p55, %p56
      %s59 = sadd.s32 %s58, 1
      %p62 = scmp.eq.s32.totalorder %s12, 1
      %p63 = scmp.ne.s32.totalorder %s58, %s60
      %p64 = scmp.eq.s32.totalorder %s12, 0
      %p65 = por %p63, %p64
      %p66 = scmp.ne.s32.totalorder %s58, %s60
      %p67 = scmp.eq.s32.totalorder %s17, 1
      %p68 = por %p66, %p67
      %p69 = scmp.ne.s32.totalorder %s60, %s61
      %p70 = scmp.eq.s32.totalorder %s17, 0
      %p71 = por %p69, %p70
      %p72 = scmp.ne.s32.totalorder %s60, %s61
      %p73 = scmp.eq.s32.totalorder %s18, 1
      %p74 = por %p72, %p73
      %p76 = scmp.ne.s32.totalorder %s61, %s75
      %p77 = scmp.eq.s32.totalorder %s18, 0
      %p78 = por %p76, %p77
      %s79 = ssub.s32 %s20, %s27
      %p80 = scmp.eq.s32.totalorder %s79, 0
      %s82 = sadd.s32 %s81, 1
      %s83 = scalar_select %p80, %s81, %s82
      %p86 = pneg %p80
      %p87 = scmp.eq.s32.totalorder %s12, 1
      %p88 = por %p86, %p87
      %p89 = scmp.ne.s32.totalorder %s81, %s84
      %p90 = scmp.eq.s32.totalorder %s12, 0
      %p91 = por %p89, %p90
      %p92 = scmp.ne.s32.totalorder %s81, %s84
      %p93 = scmp.eq.s32.totalorder %s17, 1
      %p94 = por %p92, %p93
      %p95 = scmp.ne.s32.totalorder %s84, %s85
      %p96 = scmp.eq.s32.totalorder %s17, 0
      %p97 = por %p95, %p96
      %p98 = scmp.ne.s32.totalorder %s84, %s85
      %p99 = scmp.eq.s32.totalorder %s18, 1
      %p100 = por %p98, %p99
      %p102 = scmp.ne.s32.totalorder %s85, %s101
      %p103 = scmp.eq.s32.totalorder %s18, 0
      %p104 = por %p102, %p103
      %s105 = ssub.s32 %s19, %s31
      %s106 = ssub.s32 %s20, %s27
      %s107 = sor.u32 %s105, %s106
      %p108 = scmp.eq.s32.totalorder %s107, 0
      %s110 = sadd.s32 %s109, 1
      %s111 = scalar_select %p108, %s109, %s110
      %p114 = pneg %p108
      %p115 = scmp.eq.s32.totalorder %s12, 1
      %p116 = por %p114, %p115
      %p117 = scmp.ne.s32.totalorder %s109, %s112
      %p118 = scmp.eq.s32.totalorder %s12, 0
      %p119 = por %p117, %p118
      %p120 = scmp.ne.s32.totalorder %s109, %s112
      %p121 = scmp.eq.s32.totalorder %s17, 1
      %p122 = por %p120, %p121
      %p123 = scmp.ne.s32.totalorder %s112, %s113
      %p124 = scmp.eq.s32.totalorder %s17, 0
      %p125 = por %p123, %p124
      %p126 = scmp.ne.s32.totalorder %s112, %s113
      %p127 = scmp.eq.s32.totalorder %s18, 1
      %p128 = por %p126, %p127
      %p130 = scmp.ne.s32.totalorder %s113, %s129
      %p131 = scmp.eq.s32.totalorder %s18, 0
      %p132 = por %p130, %p131
      %p133 = scmp.le.s32.totalorder 1, %s12
      %p134 = scmp.lt.s32.totalorder %s12, 3
      %p135 = pnand %p133, %p134
      %p136 = pneg %p135
      // Predicated region
      $region9: #{tpu_custom_call.1} parent=5 // pred_check
        _
      $region10: #{tpu_custom_call.1} parent=5 // pred_check_branch
        %138 = sbr.rel (%p135) target = $region12
      $region11: #{tpu_custom_call.1} parent=5 // pred_region
        %s139 = ssub.s32 %s12, 1
        // Predicated region
        $region13: #{tpu_custom_call.1} parent=11 // pred_check
          %p140 = pneg %p71
        $region14: #{tpu_custom_call.1} parent=11 // pred_check_branch
          %142 = sbr.rel (%p140) target = $region16
        $region15: #{tpu_custom_call.1} parent=11 // pred_region
          _
        $region16: #{tpu_custom_call.1} parent=11 // pred_fallthru
          _
        // Predicated region
        $region17: #{tpu_custom_call.1} parent=11 // pred_check
          %p143 = pneg %p97
        $region18: #{tpu_custom_call.1} parent=11 // pred_check_branch
          %145 = sbr.rel (%p143) target = $region20
        $region19: #{tpu_custom_call.1} parent=11 // pred_region
          %p146 = scmp.lt.s32.totalorder %s22, 0
          %s147 = scalar_select %p146, %s22, 0
          %s148 = smul.addr %s147, 8
          %s149 = scalar_lea.vmem %s2, %s148
        $region20: #{tpu_custom_call.1} parent=11 // pred_fallthru
          _
      $region12: #{tpu_custom_call.1} parent=5 // pred_fallthru
        _
      %p150 = scmp.lt.s32.totalorder %s12, 2
      // Predicated region
      $region21: #{tpu_custom_call.1} parent=5 // pred_check
        %p151 = pneg %p150
      $region22: #{tpu_custom_call.1} parent=5 // pred_check_branch
        %153 = sbr.rel (%p151) target = $region24
      $region23: #{tpu_custom_call.1} parent=5 // pred_region
        // Predicated region
        $region25: #{tpu_custom_call.1} parent=23 // pred_check
          %p154 = pneg %p44
        $region26: #{tpu_custom_call.1} parent=23 // pred_check_branch
          %156 = sbr.rel (%p154) target = $region28
        $region27: #{tpu_custom_call.1} parent=23 // pred_region
          %p157 = scmp.lt.s32.totalorder %s19, 1
          %s158 = scalar_select %p157, %s19, 1
          %s159 = smul.addr %s158, 8
          %s160 = scalar_lea.vmem %s0, %s159
        $region28: #{tpu_custom_call.1} parent=23 // pred_fallthru
          _
      $region24: #{tpu_custom_call.1} parent=5 // pred_fallthru
        _
      %p161 = scmp.le.s32.totalorder 1, %s12
      %p162 = scmp.lt.s32.totalorder %s12, 3
      %p163 = pnand %p161, %p162
      %p164 = pneg %p163
      // Predicated region
      $region29: #{tpu_custom_call.1} parent=5 // pred_check
        _
      $region30: #{tpu_custom_call.1} parent=5 // pred_check_branch
        %166 = sbr.rel (%p163) target = $region32
      $region31: #{tpu_custom_call.1} parent=5 // pred_region
        %s167 = ssub.s32 %s12, 1
        %p168 = scmp.lt.s32.totalorder %s21, 1
        %s169 = scalar_select %p168, %s21, 1
        %s170 = smul.addr %s169, 8
        %s171 = scalar_lea.vmem %s0, %s170
        %p172 = pneg %p50
        %p173 = pneg %p47
        %p174 = pneg %p71
        %p175 = pneg %p68
        %p176 = scmp.lt.s32.totalorder %s22, 0
        %s177 = scalar_select %p176, %s22, 0
        %s178 = smul.addr %s177, 8
        %s179 = scalar_lea.vmem %s2, %s178
        %p180 = pneg %p97
        %p181 = pneg %p94
        %p182 = pneg %p125
        %p183 = pneg %p122
        %s184 = sand.u32 %s112, 1
        %s185 = scalar_lea.sflag [#allocation3], %s184
        %s186 = sand.u32 %s112, 1
        %s187 = smul.addr %s186, 8
        %s188 = scalar_lea.vmem [#allocation2], %s187
        %p189 = scmp.lt.s32.totalorder %s21, 1
        %s190 = scalar_select %p189, %s21, 1
        %s191 = smul.addr %s190, 8
        %s192 = scalar_lea.vmem %s0, %s191
        %p193 = scmp.lt.s32.totalorder %s22, 0
        %s194 = scalar_select %p193, %s22, 0
        %s195 = smul.addr %s194, 8
        %s196 = scalar_lea.vmem %s2, %s195
        %v197 = vld [vmem:[%s192] sm:$0xff]
        %v198 = vld [vmem:[%s1] sm:$0xff]
        %v199 = vld [vmem:[%s1 + $0x8] sm:$0xff]
        %v200 = vld [vmem:[%s1 + $0x10] sm:$0xff]
        %v201 = vld [vmem:[%s1 + $0x18] sm:$0xff]
        %vm202 = vcmask 261120
        %v204 = vsel %vm202, %v197, 0
        %206 = vmatprep.subr.mxu0 0.0
        %207 = vmatpush1.msra.mxu0 0.0
        %208 = vmatprep.subr.mxu0 0.0
        %209 = vmatpush1.msra.mxu0 0.0
        %210 = vmatprep.subr.mxu0 0.0
        %211 = vmatpush1.msra.mxu0 0.0
        %212 = vmatprep.subr.mxu0 0.0
        %213 = vmatpush1.msra.mxu0 0.0
        %214 = vmatprep.subr.mxu0 0.0
        %215 = vmatpush1.msra.mxu0 0.0
        %216 = vmatprep.subr.mxu0 0.0
        %217 = vmatpush1.msra.mxu0 0.0
        %218 = vmatprep.subr.mxu0 0.0
        %219 = vmatpush1.msra.mxu0 0.0
        %220 = vmatprep.subr.mxu0 0.0
        %221 = vmatpush1.msra.mxu0 0.0
        %222 = vmatprep.subr.mxu0 0.0
        %223 = vmatpush1.msra.mxu0 0.0
        %224 = vmatprep.subr.mxu0 0.0
        %225 = vmatpush1.msra.mxu0 0.0
        %226 = vmatprep.subr.mxu0 0.0
        %227 = vmatpush1.msra.mxu0 0.0
        %228 = vmatprep.subr.mxu0 0.0
        %229 = vmatpush1.msra.mxu0 0.0
        %230 = vmatprep.subr.mxu0 0.0
        %231 = vmatpush1.msra.mxu0 %v201
        %232 = vmatprep.subr.mxu0 0.0
        %233 = vmatpush1.msra.mxu0 %v200
        %234 = vmatprep.subr.mxu0 0.0
        %235 = vmatpush1.msra.mxu0 %v199
        %236 = vmatprep.subr.mxu0 0.0
        %237 = vmatpush1.msra.mxu0 %v198
        %238 = vmatprep.subr.mxu0 0.0
        %239 = vmatpush2.msra.mxu0 0.0
        %240 = vmatprep.subr.mxu0 0.0
        %241 = vmatpush2.msra.mxu0 0.0
        %242 = vmatprep.subr.mxu0 0.0
        %243 = vmatpush2.msra.mxu0 0.0
        %244 = vmatprep.subr.mxu0 0.0
        %245 = vmatpush2.msra.mxu0 0.0
        %246 = vmatprep.subr.mxu0 0.0
        %247 = vmatpush2.msra.mxu0 0.0
        %248 = vmatprep.subr.mxu0 0.0
        %249 = vmatpush2.msra.mxu0 0.0
        %250 = vmatprep.subr.mxu0 0.0
        %251 = vmatpush2.msra.mxu0 0.0
        %252 = vmatprep.subr.mxu0 0.0
        %253 = vmatpush2.msra.mxu0 0.0
        %254 = vmatprep.subr.mxu0 0.0
        %255 = vmatpush2.msra.mxu0 0.0
        %256 = vmatprep.subr.mxu0 0.0
        %257 = vmatpush2.msra.mxu0 0.0
        %258 = vmatprep.subr.mxu0 0.0
        %259 = vmatpush2.msra.mxu0 0.0
        %260 = vmatprep.subr.mxu0 0.0
        %261 = vmatpush2.msra.mxu0 0.0
        %262 = vmatprep.subr.mxu0 0.0
        %263 = vmatpush2.msra.mxu0 0.0
        %264 = vmatprep.subr.mxu0 0.0
        %265 = vmatpush2.msra.mxu0 0.0
        %266 = vmatprep.subr.mxu0 0.0
        %267 = vmatpush2.msra.mxu0 0.0
        %268 = vmatprep.subr.mxu0 0.0
        %269 = vmatpush2.msra.mxu0 0.0
        %270 = vmatprep.mubr.f32.mxu0 0.0
        %271 = vmatmul.mubr.f32.gmra.mxu0 %v204
        %v272 = vpop.f32.mrf.mxu0
        %v273 = vadd.f32 0.0, %v272
        %v274 = vpop.f32.mrf.mxu0
        %275 = vdwg.mxu0
        %v276 = vmul.f32 %v273, 4.0
        %v277 = vld [vmem:[%s196] sm:$0xff]
        %vm278 = vcmask 64512
        %v280 = vsel %vm278, %v276, 0
        %282 = vmatprep.subr.mxu0 0.0
        %283 = vmatpush1.msra.mxu0 0.0
        %284 = vmatprep.subr.mxu0 0.0
        %285 = vmatpush1.msra.mxu0 0.0
        %286 = vmatprep.subr.mxu0 0.0
        %287 = vmatpush1.msra.mxu0 0.0
        %288 = vmatprep.subr.mxu0 0.0
        %289 = vmatpush1.msra.mxu0 0.0
        %290 = vmatprep.subr.mxu0 0.0
        %291 = vmatpush1.msra.mxu0 0.0
        %292 = vmatprep.subr.mxu0 0.0
        %293 = vmatpush1.msra.mxu0 0.0
        %294 = vmatprep.subr.mxu0 0.0
        %295 = vmatpush1.msra.mxu0 0.0
        %296 = vmatprep.subr.mxu0 0.0
        %297 = vmatpush1.msra.mxu0 0.0
        %298 = vmatprep.subr.mxu0 0.0
        %299 = vmatpush1.msra.mxu0 0.0
        %300 = vmatprep.subr.mxu0 0.0
        %301 = vmatpush1.msra.mxu0 0.0
        %302 = vmatprep.subr.mxu0 0.0
        %303 = vmatpush1.msra.mxu0 0.0
        %304 = vmatprep.subr.mxu0 0.0
        %305 = vmatpush1.msra.mxu0 0.0
        %306 = vmatprep.subr.mxu0 0.0
        %307 = vmatpush1.msra.mxu0 0.0
        %308 = vmatprep.subr.mxu0 0.0
        %309 = vmatpush1.msra.mxu0 0.0
        %310 = vmatprep.subr.mxu0 0.0
        %311 = vmatpush1.msra.mxu0 0.0
        %312 = vmatprep.subr.mxu0 0.0
        %313 = vmatpush1.msra.mxu0 %v277
        %314 = vmatprep.subr.mxu0 0.0
        %315 = vmatpush2.msra.mxu0 0.0
        %316 = vmatprep.subr.mxu0 0.0
        %317 = vmatpush2.msra.mxu0 0.0
        %318 = vmatprep.subr.mxu0 0.0
        %319 = vmatpush2.msra.mxu0 0.0
        %320 = vmatprep.subr.mxu0 0.0
        %321 = vmatpush2.msra.mxu0 0.0
        %322 = vmatprep.subr.mxu0 0.0
        %323 = vmatpush2.msra.mxu0 0.0
        %324 = vmatprep.subr.mxu0 0.0
        %325 = vmatpush2.msra.mxu0 0.0
        %326 = vmatprep.subr.mxu0 0.0
        %327 = vmatpush2.msra.mxu0 0.0
        %328 = vmatprep.subr.mxu0 0.0
        %329 = vmatpush2.msra.mxu0 0.0
        %330 = vmatprep.subr.mxu0 0.0
        %331 = vmatpush2.msra.mxu0 0.0
        %332 = vmatprep.subr.mxu0 0.0
        %333 = vmatpush2.msra.mxu0 0.0
        %334 = vmatprep.subr.mxu0 0.0
        %335 = vmatpush2.msra.mxu0 0.0
        %336 = vmatprep.subr.mxu0 0.0
        %337 = vmatpush2.msra.mxu0 0.0
        %338 = vmatprep.subr.mxu0 0.0
        %339 = vmatpush2.msra.mxu0 0.0
        %340 = vmatprep.subr.mxu0 0.0
        %341 = vmatpush2.msra.mxu0 0.0
        %342 = vmatprep.subr.mxu0 0.0
        %343 = vmatpush2.msra.mxu0 0.0
        %344 = vmatprep.subr.mxu0 0.0
        %345 = vmatpush2.msra.mxu0 0.0
        %346 = vmatprep.mubr.f32.mxu0 0.0
        %347 = vmatmul.mubr.f32.gmra.mxu0 %v280
        %v348 = vpop.f32.mrf.mxu0
        %v349 = vadd.f32 0.0, %v348
        %v350 = vpop.f32.mrf.mxu0
        %351 = vdwg.mxu0
        %352 = vst [vmem:[%s188] sm:$0xff] %v349
        %s353 = sand.u32 %s112, 1
        %s354 = scalar_lea.sflag [#allocation3], %s353
        %s355 = sand.u32 %s112, 1
        %s356 = smul.addr %s355, 8
        %s357 = scalar_lea.vmem [#allocation2], %s356
        // Predicated region
        $region33: #{tpu_custom_call.1} parent=31 // pred_check
          %p358 = pneg %p122
        $region34: #{tpu_custom_call.1} parent=31 // pred_check_branch
          %360 = sbr.rel (%p358) target = $region36
        $region35: #{tpu_custom_call.1} parent=31 // pred_region
          %s362 = ssub.s32 128, 128
          %363 = vsyncadd %s354, %s362
          %s364 = sadd.s32 %s22, %s21
          %s365 = smul.addr %s364, 128
          %s366 = scalar_lea.hbm %s3, %s365
          %s368 = sshll.u32 %s357, 4
          %s369 = int_to_ptr.vmem [resolvable:$true] %s368
          %371 = dma.vmem_to_hbm [thread:$0]  %s369, 128, %s366, %s354
        $region36: #{tpu_custom_call.1} parent=31 // pred_fallthru
          _
      $region32: #{tpu_custom_call.1} parent=5 // pred_fallthru
        _
      %p372 = scmp.le.s32.totalorder 2, %s12
      // Predicated region
      $region37: #{tpu_custom_call.1} parent=5 // pred_check
        %p373 = pneg %p372
      $region38: #{tpu_custom_call.1} parent=5 // pred_check_branch
        %375 = sbr.rel (%p373) target = $region40
      $region39: #{tpu_custom_call.1} parent=5 // pred_region
        %s376 = ssub.s32 %s12, 2
        // Predicated region
        $region41: #{tpu_custom_call.1} parent=39 // pred_check
          %p377 = pneg %p128
        $region42: #{tpu_custom_call.1} parent=39 // pred_check_branch
          %379 = sbr.rel (%p377) target = $region44
        $region43: #{tpu_custom_call.1} parent=39 // pred_region
          %s380 = sand.u32 %s113, 1
          %s381 = scalar_lea.sflag [#allocation3], %s380
          %s382 = sand.u32 %s113, 1
          %s383 = smul.addr %s382, 8
          %s384 = scalar_lea.vmem [#allocation2], %s383
          %385 = dma.done %s381, 128
        $region44: #{tpu_custom_call.1} parent=39 // pred_fallthru
          _
      $region40: #{tpu_custom_call.1} parent=5 // pred_fallthru
        _
    $region6: #{tpu_custom_call.1} parent=1 // loop_footer
      %s16 = sadd.s32 1, %s12
    $region7: #{tpu_custom_call.1} parent=1 // loop_footer_branch
      %11 = sbr.rel target = $region3
    $region8: #{tpu_custom_call.1} parent=1 // loop_exit
      _
    %386 = vsyncpa [#allocation3], 1
    %s387 = scalar_lea.sflag [#allocation3], 1
    %388 = vsyncpa %s387, 1

</llo_original>
